<compile_context>
chip_gen: v5e
topology: v5e:2x2
jax: 0.10.0
libtpu: 0.0.40
codegen_flags: <defaults>
</compile_context>

<pallas_src>
import functools

import jax
import jax.numpy as jnp
from jax.experimental import pallas as pl
from jax.experimental.pallas import tpu as pltpu


def _round_up(n, m):
    return ((n + m - 1) // m) * m


def rnn_fc_kernel(x_ref, w_ih_ref, w_hh_ref, bias_ref, w_fc_ref, b_fc_ref, out_ref,
                  *, seq_len, hidden_size, use_mxu):
    """RNN(tanh) recurrence + final Linear; everything VMEM/vreg resident.

    x_ref:    (B_pad, T_pad)   one scalar input per (row, time step), lane-dense over T
    w_ih_ref: (1, H_pad)       W_ih^T as a row vector (input_size == 1)
    w_hh_ref: (H_pad, H_pad)   W_hh^T (f32, zero padded)
    bias_ref: (1, H_pad)       b_ih + b_hh, pre-summed
    w_fc_ref: (H_pad, O_pad)   W_fc^T
    b_fc_ref: (1, O_pad)
    out_ref:  (B_pad, O_pad)
    """
    B_pad = out_ref.shape[0]
    H_pad = w_hh_ref.shape[1]

    # ---- One-time, loop-invariant loads / broadcasts (hoisted out of the unroll). ----
    x_all = x_ref[...]                                            # (B_pad, T_pad), 1 vreg
    w_ih_b = jnp.broadcast_to(w_ih_ref[...], (B_pad, H_pad))      # (B_pad, H_pad)
    bias_b = jnp.broadcast_to(bias_ref[...], (B_pad, H_pad))      # (B_pad, H_pad)

    if use_mxu:
        w_hh = w_hh_ref[...]                                      # (H_pad, H_pad)
        w_rows = None
    else:
        # Only `hidden_size` rows of W_hh^T are live; pre-broadcast each across the
        # batch sublanes once (hidden_size vregs at B_pad == 8).
        w_rows = [jnp.broadcast_to(w_hh_ref[i:i + 1, :], (B_pad, H_pad))
                  for i in range(hidden_size)]

    # h0 = zeros, as in the PyTorch forward.  Carried in vregs across the unrolled loop.
    h = jnp.zeros((B_pad, H_pad), jnp.float32)

    for t in range(seq_len):
        # h-independent input projection: off the serial chain, scheduler hoists it.
        pre = x_all[:, t:t + 1] * w_ih_b + bias_b                 # (B_pad, H_pad)

        if use_mxu:
            hh = jnp.dot(h, w_hh, preferred_element_type=jnp.float32)       # MXU
        else:
            # VPU/XLU recurrence: hh = sum_i h[:, i] * W_hh^T[i, :]
            # (10 lane-broadcast multiplies + log-depth add tree).
            terms = [h[:, i:i + 1] * w_rows[i] for i in range(hidden_size)]
            while len(terms) > 1:
                nxt = [terms[j] + terms[j + 1] for j in range(0, len(terms) - 1, 2)]
                if len(terms) % 2:
                    nxt.append(terms[-1])
                terms = nxt
            hh = terms[0]

        h = jnp.tanh(pre + hh)                                               # EUP

    # fc(out[:, -1, :]) -> only the last hidden state feeds the Linear layer.
    out_ref[...] = (jnp.dot(h, w_fc_ref[...], preferred_element_type=jnp.float32)
                    + b_fc_ref[...])


def pack_params(params, hidden_size=10, output_size=1):
    """One-time packing: zero-pad, transpose, pre-sum biases.  Call once, reuse."""
    w_ih, w_hh, b_ih, b_hh, w_fc, b_fc = params
    H_pad = _round_up(max(hidden_size, 1), 128)
    O_pad = _round_up(max(output_size, 1), 128)
    # Padding is inert: padded hidden units stay exactly 0 through tanh and the FC.
    w_ih_row = jnp.zeros((1, H_pad), jnp.float32).at[0, :hidden_size].set(
        w_ih[:, 0].astype(jnp.float32))
    w_hh_t = jnp.zeros((H_pad, H_pad), jnp.float32).at[
        :hidden_size, :hidden_size].set(w_hh.T.astype(jnp.float32))
    bias_p = jnp.zeros((1, H_pad), jnp.float32).at[0, :hidden_size].set(
        (b_ih + b_hh).astype(jnp.float32))
    w_fc_t = jnp.zeros((H_pad, O_pad), jnp.float32).at[
        :hidden_size, :output_size].set(w_fc.T.astype(jnp.float32))
    b_fc_p = jnp.zeros((1, O_pad), jnp.float32).at[0, :output_size].set(
        b_fc.astype(jnp.float32))
    return (w_ih_row, w_hh_t, bias_p, w_fc_t, b_fc_p)


@functools.partial(jax.jit, static_argnames=("hidden_size", "output_size", "use_mxu"))
def simple_rnn_forward(x, packed, *, hidden_size=10, output_size=1, use_mxu=False):
    """x: (B, T, 1) float32 -> (B, output_size) float32, using pre-packed params."""
    w_ih_row, w_hh_t, bias_p, w_fc_t, b_fc_p = packed
    B, T, I = x.shape
    if I != 1:
        raise NotImplementedError("kernel is specialized for input_size == 1 (module spec)")
    if T > 128:
        raise NotImplementedError("statically-unrolled kernel expects T <= 128")

    B_pad = max(8, _round_up(B, 8))
    T_pad = 128
    H_pad = w_hh_t.shape[0]
    O_pad = w_fc_t.shape[1]

    # Per-call work: only the lane-dense x pad (one (8,128) f32 tile for T <= 128).
    x_p = jnp.zeros((B_pad, T_pad), jnp.float32).at[:B, :T].set(
        x[:, :, 0].astype(jnp.float32))

    out_p = pl.pallas_call(
        functools.partial(rnn_fc_kernel, seq_len=T, hidden_size=hidden_size,
                          use_mxu=use_mxu),
        out_shape=jax.ShapeDtypeStruct((B_pad, O_pad), jnp.float32),
        in_specs=[pl.BlockSpec(memory_space=pltpu.MemorySpace.VMEM) for _ in range(6)],
        out_specs=pl.BlockSpec(memory_space=pltpu.MemorySpace.VMEM),
    )(x_p, w_ih_row, w_hh_t, bias_p, w_fc_t, b_fc_p)

    return out_p[:B, :output_size]


def simple_rnn_reference(x, params):
    """Pure-JAX reference (matches torch nn.RNN tanh + Linear semantics)."""
    w_ih, w_hh, b_ih, b_hh, w_fc, b_fc = params
    B, T, _ = x.shape
    h = jnp.zeros((B, w_hh.shape[0]), jnp.float32)
    for t in range(T):
        h = jnp.tanh(x[:, t, :] @ w_ih.T + b_ih + h @ w_hh.T + b_hh)
    return h @ w_fc.T + b_fc


def init_params(key, input_size=1, hidden_size=10, output_size=1):
    # PyTorch-style uniform(-1/sqrt(H), 1/sqrt(H)) init, deterministic via PRNGKey.
    k = 1.0 / jnp.sqrt(jnp.float32(hidden_size))
    keys = jax.random.split(key, 6)
    w_ih = jax.random.uniform(keys[0], (hidden_size, input_size), jnp.float32, -k, k)
    w_hh = jax.random.uniform(keys[1], (hidden_size, hidden_size), jnp.float32, -k, k)
    b_ih = jax.random.uniform(keys[2], (hidden_size,), jnp.float32, -k, k)
    b_hh = jax.random.uniform(keys[3], (hidden_size,), jnp.float32, -k, k)
    w_fc = jax.random.uniform(keys[4], (output_size, hidden_size), jnp.float32, -k, k)
    b_fc = jax.random.uniform(keys[5], (output_size,), jnp.float32, -k, k)
    return (w_ih, w_hh, b_ih, b_hh, w_fc, b_fc)


if __name__ == "__main__":
    key = jax.random.PRNGKey(0)
    k_param, k_x = jax.random.split(key)

    input_size, hidden_size, output_size = 1, 10, 1
    B, T = 2, 8
    params = init_params(k_param, input_size, hidden_size, output_size)
    x = jax.random.normal(k_x, (B, T, input_size), jnp.float32)

    packed = pack_params(params, hidden_size, output_size)   # one-time packing
    ref = simple_rnn_reference(x, params)

    # Default path: VPU/XLU 10-wide recurrence (f32, exact-order-independent parity).
    out = simple_rnn_forward(x, packed, hidden_size=hidden_size,
                             output_size=output_size)
    out = jax.block_until_ready(out)
    assert out.shape == (B, output_size)
    assert jnp.allclose(out, ref, atol=1e-5, rtol=1e-5)

    # f32 MXU path (A/B option), same tolerance.
    out_mxu = simple_rnn_forward(x, packed, hidden_size=hidden_size,
                                 output_size=output_size, use_mxu=True)
    out_mxu = jax.block_until_ready(out_mxu)
    assert jnp.allclose(out_mxu, ref, atol=1e-5, rtol=1e-5)

    print("KERNEL_OK")
</pallas_src>

<mosaic_0001>
module attributes {stable_mosaic.version = 11 : i64} {
  func.func @rnn_fc_kernel(%arg0: memref<8x128xf32, #tpu.memory_space<vmem>>, %arg1: memref<1x128xf32, #tpu.memory_space<vmem>>, %arg2: memref<128x128xf32, #tpu.memory_space<vmem>>, %arg3: memref<1x128xf32, #tpu.memory_space<vmem>>, %arg4: memref<128x128xf32, #tpu.memory_space<vmem>>, %arg5: memref<1x128xf32, #tpu.memory_space<vmem>>, %arg6: memref<8x128xf32, #tpu.memory_space<vmem>>) attributes {dimension_semantics = [], scalar_prefetch = 0 : i64, scratch_operands = 0 : i64, tpu.core_type = #tpu.core_type<tc>} {
    %c0 = arith.constant 0 : index
    %c0_0 = arith.constant 0 : index
    %0 = vector.load %arg0[%c0, %c0_0] : memref<8x128xf32, #tpu.memory_space<vmem>>, vector<8x128xf32>
    %c0_1 = arith.constant 0 : index
    %c0_2 = arith.constant 0 : index
    %1 = vector.load %arg1[%c0_1, %c0_2] : memref<1x128xf32, #tpu.memory_space<vmem>>, vector<1x128xf32>
    %2 = vector.shape_cast %1 : vector<1x128xf32> to vector<1x128xf32>
    %3 = vector.broadcast %2 : vector<1x128xf32> to vector<8x128xf32>
    %c0_3 = arith.constant 0 : index
    %c0_4 = arith.constant 0 : index
    %4 = vector.load %arg3[%c0_3, %c0_4] : memref<1x128xf32, #tpu.memory_space<vmem>>, vector<1x128xf32>
    %5 = vector.shape_cast %4 : vector<1x128xf32> to vector<1x128xf32>
    %6 = vector.broadcast %5 : vector<1x128xf32> to vector<8x128xf32>
    %c0_5 = arith.constant 0 : index
    %c0_6 = arith.constant 0 : index
    %7 = vector.load %arg2[%c0_5, %c0_6] : memref<128x128xf32, #tpu.memory_space<vmem>>, vector<1x128xf32>
    %8 = vector.shape_cast %7 : vector<1x128xf32> to vector<1x128xf32>
    %9 = vector.broadcast %8 : vector<1x128xf32> to vector<8x128xf32>
    %c1 = arith.constant 1 : index
    %c0_7 = arith.constant 0 : index
    %10 = vector.load %arg2[%c1, %c0_7] : memref<128x128xf32, #tpu.memory_space<vmem>>, vector<1x128xf32>
    %11 = vector.shape_cast %10 : vector<1x128xf32> to vector<1x128xf32>
    %12 = vector.broadcast %11 : vector<1x128xf32> to vector<8x128xf32>
    %c2 = arith.constant 2 : index
    %c0_8 = arith.constant 0 : index
    %13 = vector.load %arg2[%c2, %c0_8] : memref<128x128xf32, #tpu.memory_space<vmem>>, vector<1x128xf32>
    %14 = vector.shape_cast %13 : vector<1x128xf32> to vector<1x128xf32>
    %15 = vector.broadcast %14 : vector<1x128xf32> to vector<8x128xf32>
    %c3 = arith.constant 3 : index
    %c0_9 = arith.constant 0 : index
    %16 = vector.load %arg2[%c3, %c0_9] : memref<128x128xf32, #tpu.memory_space<vmem>>, vector<1x128xf32>
    %17 = vector.shape_cast %16 : vector<1x128xf32> to vector<1x128xf32>
    %18 = vector.broadcast %17 : vector<1x128xf32> to vector<8x128xf32>
    %c4 = arith.constant 4 : index
    %c0_10 = arith.constant 0 : index
    %19 = vector.load %arg2[%c4, %c0_10] : memref<128x128xf32, #tpu.memory_space<vmem>>, vector<1x128xf32>
    %20 = vector.shape_cast %19 : vector<1x128xf32> to vector<1x128xf32>
    %21 = vector.broadcast %20 : vector<1x128xf32> to vector<8x128xf32>
    %c5 = arith.constant 5 : index
    %c0_11 = arith.constant 0 : index
    %22 = vector.load %arg2[%c5, %c0_11] : memref<128x128xf32, #tpu.memory_space<vmem>>, vector<1x128xf32>
    %23 = vector.shape_cast %22 : vector<1x128xf32> to vector<1x128xf32>
    %24 = vector.broadcast %23 : vector<1x128xf32> to vector<8x128xf32>
    %c6 = arith.constant 6 : index
    %c0_12 = arith.constant 0 : index
    %25 = vector.load %arg2[%c6, %c0_12] : memref<128x128xf32, #tpu.memory_space<vmem>>, vector<1x128xf32>
    %26 = vector.shape_cast %25 : vector<1x128xf32> to vector<1x128xf32>
    %27 = vector.broadcast %26 : vector<1x128xf32> to vector<8x128xf32>
    %c7 = arith.constant 7 : index
    %c0_13 = arith.constant 0 : index
    %28 = vector.load %arg2[%c7, %c0_13] : memref<128x128xf32, #tpu.memory_space<vmem>>, vector<1x128xf32>
    %29 = vector.shape_cast %28 : vector<1x128xf32> to vector<1x128xf32>
    %30 = vector.broadcast %29 : vector<1x128xf32> to vector<8x128xf32>
    %c8 = arith.constant 8 : index
    %c0_14 = arith.constant 0 : index
    %31 = vector.load %arg2[%c8, %c0_14] : memref<128x128xf32, #tpu.memory_space<vmem>>, vector<1x128xf32>
    %32 = vector.shape_cast %31 : vector<1x128xf32> to vector<1x128xf32>
    %33 = vector.broadcast %32 : vector<1x128xf32> to vector<8x128xf32>
    %c9 = arith.constant 9 : index
    %c0_15 = arith.constant 0 : index
    %34 = vector.load %arg2[%c9, %c0_15] : memref<128x128xf32, #tpu.memory_space<vmem>>, vector<1x128xf32>
    %35 = vector.shape_cast %34 : vector<1x128xf32> to vector<1x128xf32>
    %36 = vector.broadcast %35 : vector<1x128xf32> to vector<8x128xf32>
    %cst = arith.constant 0.000000e+00 : f32
    %37 = vector.broadcast %cst : f32 to vector<8x128xf32>
    %38 = vector.extract_strided_slice %0 {offsets = [0, 0], sizes = [8, 1], strides = [1, 1]} : vector<8x128xf32> to vector<8x1xf32>
    %39 = vector.broadcast %38 : vector<8x1xf32> to vector<8x128xf32>
    %40 = arith.mulf %39, %3 : vector<8x128xf32>
    %41 = arith.addf %40, %6 : vector<8x128xf32>
    %42 = vector.extract_strided_slice %37 {offsets = [0, 0], sizes = [8, 1], strides = [1, 1]} : vector<8x128xf32> to vector<8x1xf32>
    %43 = vector.broadcast %42 : vector<8x1xf32> to vector<8x128xf32>
    %44 = arith.mulf %43, %9 : vector<8x128xf32>
    %45 = vector.extract_strided_slice %37 {offsets = [0, 1], sizes = [8, 1], strides = [1, 1]} : vector<8x128xf32> to vector<8x1xf32>
    %46 = vector.broadcast %45 : vector<8x1xf32> to vector<8x128xf32>
    %47 = arith.mulf %46, %12 : vector<8x128xf32>
    %48 = vector.extract_strided_slice %37 {offsets = [0, 2], sizes = [8, 1], strides = [1, 1]} : vector<8x128xf32> to vector<8x1xf32>
    %49 = vector.broadcast %48 : vector<8x1xf32> to vector<8x128xf32>
    %50 = arith.mulf %49, %15 : vector<8x128xf32>
    %51 = vector.extract_strided_slice %37 {offsets = [0, 3], sizes = [8, 1], strides = [1, 1]} : vector<8x128xf32> to vector<8x1xf32>
    %52 = vector.broadcast %51 : vector<8x1xf32> to vector<8x128xf32>
    %53 = arith.mulf %52, %18 : vector<8x128xf32>
    %54 = vector.extract_strided_slice %37 {offsets = [0, 4], sizes = [8, 1], strides = [1, 1]} : vector<8x128xf32> to vector<8x1xf32>
    %55 = vector.broadcast %54 : vector<8x1xf32> to vector<8x128xf32>
    %56 = arith.mulf %55, %21 : vector<8x128xf32>
    %57 = vector.extract_strided_slice %37 {offsets = [0, 5], sizes = [8, 1], strides = [1, 1]} : vector<8x128xf32> to vector<8x1xf32>
    %58 = vector.broadcast %57 : vector<8x1xf32> to vector<8x128xf32>
    %59 = arith.mulf %58, %24 : vector<8x128xf32>
    %60 = vector.extract_strided_slice %37 {offsets = [0, 6], sizes = [8, 1], strides = [1, 1]} : vector<8x128xf32> to vector<8x1xf32>
    %61 = vector.broadcast %60 : vector<8x1xf32> to vector<8x128xf32>
    %62 = arith.mulf %61, %27 : vector<8x128xf32>
    %63 = vector.extract_strided_slice %37 {offsets = [0, 7], sizes = [8, 1], strides = [1, 1]} : vector<8x128xf32> to vector<8x1xf32>
    %64 = vector.broadcast %63 : vector<8x1xf32> to vector<8x128xf32>
    %65 = arith.mulf %64, %30 : vector<8x128xf32>
    %66 = vector.extract_strided_slice %37 {offsets = [0, 8], sizes = [8, 1], strides = [1, 1]} : vector<8x128xf32> to vector<8x1xf32>
    %67 = vector.broadcast %66 : vector<8x1xf32> to vector<8x128xf32>
    %68 = arith.mulf %67, %33 : vector<8x128xf32>
    %69 = vector.extract_strided_slice %37 {offsets = [0, 9], sizes = [8, 1], strides = [1, 1]} : vector<8x128xf32> to vector<8x1xf32>
    %70 = vector.broadcast %69 : vector<8x1xf32> to vector<8x128xf32>
    %71 = arith.mulf %70, %36 : vector<8x128xf32>
    %72 = arith.addf %44, %47 : vector<8x128xf32>
    %73 = arith.addf %50, %53 : vector<8x128xf32>
    %74 = arith.addf %56, %59 : vector<8x128xf32>
    %75 = arith.addf %62, %65 : vector<8x128xf32>
    %76 = arith.addf %68, %71 : vector<8x128xf32>
    %77 = arith.addf %72, %73 : vector<8x128xf32>
    %78 = arith.addf %74, %75 : vector<8x128xf32>
    %79 = arith.addf %77, %78 : vector<8x128xf32>
    %80 = arith.addf %79, %76 : vector<8x128xf32>
    %81 = arith.addf %41, %80 : vector<8x128xf32>
    %82 = math.tanh %81 : vector<8x128xf32>
    %83 = vector.extract_strided_slice %0 {offsets = [0, 1], sizes = [8, 1], strides = [1, 1]} : vector<8x128xf32> to vector<8x1xf32>
    %84 = vector.broadcast %83 : vector<8x1xf32> to vector<8x128xf32>
    %85 = arith.mulf %84, %3 : vector<8x128xf32>
    %86 = arith.addf %85, %6 : vector<8x128xf32>
    %87 = vector.extract_strided_slice %82 {offsets = [0, 0], sizes = [8, 1], strides = [1, 1]} : vector<8x128xf32> to vector<8x1xf32>
    %88 = vector.broadcast %87 : vector<8x1xf32> to vector<8x128xf32>
    %89 = arith.mulf %88, %9 : vector<8x128xf32>
    %90 = vector.extract_strided_slice %82 {offsets = [0, 1], sizes = [8, 1], strides = [1, 1]} : vector<8x128xf32> to vector<8x1xf32>
    %91 = vector.broadcast %90 : vector<8x1xf32> to vector<8x128xf32>
    %92 = arith.mulf %91, %12 : vector<8x128xf32>
    %93 = vector.extract_strided_slice %82 {offsets = [0, 2], sizes = [8, 1], strides = [1, 1]} : vector<8x128xf32> to vector<8x1xf32>
    %94 = vector.broadcast %93 : vector<8x1xf32> to vector<8x128xf32>
    %95 = arith.mulf %94, %15 : vector<8x128xf32>
    %96 = vector.extract_strided_slice %82 {offsets = [0, 3], sizes = [8, 1], strides = [1, 1]} : vector<8x128xf32> to vector<8x1xf32>
    %97 = vector.broadcast %96 : vector<8x1xf32> to vector<8x128xf32>
    %98 = arith.mulf %97, %18 : vector<8x128xf32>
    %99 = vector.extract_strided_slice %82 {offsets = [0, 4], sizes = [8, 1], strides = [1, 1]} : vector<8x128xf32> to vector<8x1xf32>
    %100 = vector.broadcast %99 : vector<8x1xf32> to vector<8x128xf32>
    %101 = arith.mulf %100, %21 : vector<8x128xf32>
    %102 = vector.extract_strided_slice %82 {offsets = [0, 5], sizes = [8, 1], strides = [1, 1]} : vector<8x128xf32> to vector<8x1xf32>
    %103 = vector.broadcast %102 : vector<8x1xf32> to vector<8x128xf32>
    %104 = arith.mulf %103, %24 : vector<8x128xf32>
    %105 = vector.extract_strided_slice %82 {offsets = [0, 6], sizes = [8, 1], strides = [1, 1]} : vector<8x128xf32> to vector<8x1xf32>
    %106 = vector.broadcast %105 : vector<8x1xf32> to vector<8x128xf32>
    %107 = arith.mulf %106, %27 : vector<8x128xf32>
    %108 = vector.extract_strided_slice %82 {offsets = [0, 7], sizes = [8, 1], strides = [1, 1]} : vector<8x128xf32> to vector<8x1xf32>
    %109 = vector.broadcast %108 : vector<8x1xf32> to vector<8x128xf32>
    %110 = arith.mulf %109, %30 : vector<8x128xf32>
    %111 = vector.extract_strided_slice %82 {offsets = [0, 8], sizes = [8, 1], strides = [1, 1]} : vector<8x128xf32> to vector<8x1xf32>
    %112 = vector.broadcast %111 : vector<8x1xf32> to vector<8x128xf32>
    %113 = arith.mulf %112, %33 : vector<8x128xf32>
    %114 = vector.extract_strided_slice %82 {offsets = [0, 9], sizes = [8, 1], strides = [1, 1]} : vector<8x128xf32> to vector<8x1xf32>
    %115 = vector.broadcast %114 : vector<8x1xf32> to vector<8x128xf32>
    %116 = arith.mulf %115, %36 : vector<8x128xf32>
    %117 = arith.addf %89, %92 : vector<8x128xf32>
    %118 = arith.addf %95, %98 : vector<8x128xf32>
    %119 = arith.addf %101, %104 : vector<8x128xf32>
    %120 = arith.addf %107, %110 : vector<8x128xf32>
    %121 = arith.addf %113, %116 : vector<8x128xf32>
    %122 = arith.addf %117, %118 : vector<8x128xf32>
    %123 = arith.addf %119, %120 : vector<8x128xf32>
    %124 = arith.addf %122, %123 : vector<8x128xf32>
    %125 = arith.addf %124, %121 : vector<8x128xf32>
    %126 = arith.addf %86, %125 : vector<8x128xf32>
    %127 = math.tanh %126 : vector<8x128xf32>
    %128 = vector.extract_strided_slice %0 {offsets = [0, 2], sizes = [8, 1], strides = [1, 1]} : vector<8x128xf32> to vector<8x1xf32>
    %129 = vector.broadcast %128 : vector<8x1xf32> to vector<8x128xf32>
    %130 = arith.mulf %129, %3 : vector<8x128xf32>
    %131 = arith.addf %130, %6 : vector<8x128xf32>
    %132 = vector.extract_strided_slice %127 {offsets = [0, 0], sizes = [8, 1], strides = [1, 1]} : vector<8x128xf32> to vector<8x1xf32>
    %133 = vector.broadcast %132 : vector<8x1xf32> to vector<8x128xf32>
    %134 = arith.mulf %133, %9 : vector<8x128xf32>
    %135 = vector.extract_strided_slice %127 {offsets = [0, 1], sizes = [8, 1], strides = [1, 1]} : vector<8x128xf32> to vector<8x1xf32>
    %136 = vector.broadcast %135 : vector<8x1xf32> to vector<8x128xf32>
    %137 = arith.mulf %136, %12 : vector<8x128xf32>
    %138 = vector.extract_strided_slice %127 {offsets = [0, 2], sizes = [8, 1], strides = [1, 1]} : vector<8x128xf32> to vector<8x1xf32>
    %139 = vector.broadcast %138 : vector<8x1xf32> to vector<8x128xf32>
    %140 = arith.mulf %139, %15 : vector<8x128xf32>
    %141 = vector.extract_strided_slice %127 {offsets = [0, 3], sizes = [8, 1], strides = [1, 1]} : vector<8x128xf32> to vector<8x1xf32>
    %142 = vector.broadcast %141 : vector<8x1xf32> to vector<8x128xf32>
    %143 = arith.mulf %142, %18 : vector<8x128xf32>
    %144 = vector.extract_strided_slice %127 {offsets = [0, 4], sizes = [8, 1], strides = [1, 1]} : vector<8x128xf32> to vector<8x1xf32>
    %145 = vector.broadcast %144 : vector<8x1xf32> to vector<8x128xf32>
    %146 = arith.mulf %145, %21 : vector<8x128xf32>
    %147 = vector.extract_strided_slice %127 {offsets = [0, 5], sizes = [8, 1], strides = [1, 1]} : vector<8x128xf32> to vector<8x1xf32>
    %148 = vector.broadcast %147 : vector<8x1xf32> to vector<8x128xf32>
    %149 = arith.mulf %148, %24 : vector<8x128xf32>
    %150 = vector.extract_strided_slice %127 {offsets = [0, 6], sizes = [8, 1], strides = [1, 1]} : vector<8x128xf32> to vector<8x1xf32>
    %151 = vector.broadcast %150 : vector<8x1xf32> to vector<8x128xf32>
    %152 = arith.mulf %151, %27 : vector<8x128xf32>
    %153 = vector.extract_strided_slice %127 {offsets = [0, 7], sizes = [8, 1], strides = [1, 1]} : vector<8x128xf32> to vector<8x1xf32>
    %154 = vector.broadcast %153 : vector<8x1xf32> to vector<8x128xf32>
    %155 = arith.mulf %154, %30 : vector<8x128xf32>
    %156 = vector.extract_strided_slice %127 {offsets = [0, 8], sizes = [8, 1], strides = [1, 1]} : vector<8x128xf32> to vector<8x1xf32>
    %157 = vector.broadcast %156 : vector<8x1xf32> to vector<8x128xf32>
    %158 = arith.mulf %157, %33 : vector<8x128xf32>
    %159 = vector.extract_strided_slice %127 {offsets = [0, 9], sizes = [8, 1], strides = [1, 1]} : vector<8x128xf32> to vector<8x1xf32>
    %160 = vector.broadcast %159 : vector<8x1xf32> to vector<8x128xf32>
    %161 = arith.mulf %160, %36 : vector<8x128xf32>
    %162 = arith.addf %134, %137 : vector<8x128xf32>
    %163 = arith.addf %140, %143 : vector<8x128xf32>
    %164 = arith.addf %146, %149 : vector<8x128xf32>
    %165 = arith.addf %152, %155 : vector<8x128xf32>
    %166 = arith.addf %158, %161 : vector<8x128xf32>
    %167 = arith.addf %162, %163 : vector<8x128xf32>
    %168 = arith.addf %164, %165 : vector<8x128xf32>
    %169 = arith.addf %167, %168 : vector<8x128xf32>
    %170 = arith.addf %169, %166 : vector<8x128xf32>
    %171 = arith.addf %131, %170 : vector<8x128xf32>
    %172 = math.tanh %171 : vector<8x128xf32>
    %173 = vector.extract_strided_slice %0 {offsets = [0, 3], sizes = [8, 1], strides = [1, 1]} : vector<8x128xf32> to vector<8x1xf32>
    %174 = vector.broadcast %173 : vector<8x1xf32> to vector<8x128xf32>
    %175 = arith.mulf %174, %3 : vector<8x128xf32>
    %176 = arith.addf %175, %6 : vector<8x128xf32>
    %177 = vector.extract_strided_slice %172 {offsets = [0, 0], sizes = [8, 1], strides = [1, 1]} : vector<8x128xf32> to vector<8x1xf32>
    %178 = vector.broadcast %177 : vector<8x1xf32> to vector<8x128xf32>
    %179 = arith.mulf %178, %9 : vector<8x128xf32>
    %180 = vector.extract_strided_slice %172 {offsets = [0, 1], sizes = [8, 1], strides = [1, 1]} : vector<8x128xf32> to vector<8x1xf32>
    %181 = vector.broadcast %180 : vector<8x1xf32> to vector<8x128xf32>
    %182 = arith.mulf %181, %12 : vector<8x128xf32>
    %183 = vector.extract_strided_slice %172 {offsets = [0, 2], sizes = [8, 1], strides = [1, 1]} : vector<8x128xf32> to vector<8x1xf32>
    %184 = vector.broadcast %183 : vector<8x1xf32> to vector<8x128xf32>
    %185 = arith.mulf %184, %15 : vector<8x128xf32>
    %186 = vector.extract_strided_slice %172 {offsets = [0, 3], sizes = [8, 1], strides = [1, 1]} : vector<8x128xf32> to vector<8x1xf32>
    %187 = vector.broadcast %186 : vector<8x1xf32> to vector<8x128xf32>
    %188 = arith.mulf %187, %18 : vector<8x128xf32>
    %189 = vector.extract_strided_slice %172 {offsets = [0, 4], sizes = [8, 1], strides = [1, 1]} : vector<8x128xf32> to vector<8x1xf32>
    %190 = vector.broadcast %189 : vector<8x1xf32> to vector<8x128xf32>
    %191 = arith.mulf %190, %21 : vector<8x128xf32>
    %192 = vector.extract_strided_slice %172 {offsets = [0, 5], sizes = [8, 1], strides = [1, 1]} : vector<8x128xf32> to vector<8x1xf32>
    %193 = vector.broadcast %192 : vector<8x1xf32> to vector<8x128xf32>
    %194 = arith.mulf %193, %24 : vector<8x128xf32>
    %195 = vector.extract_strided_slice %172 {offsets = [0, 6], sizes = [8, 1], strides = [1, 1]} : vector<8x128xf32> to vector<8x1xf32>
    %196 = vector.broadcast %195 : vector<8x1xf32> to vector<8x128xf32>
    %197 = arith.mulf %196, %27 : vector<8x128xf32>
    %198 = vector.extract_strided_slice %172 {offsets = [0, 7], sizes = [8, 1], strides = [1, 1]} : vector<8x128xf32> to vector<8x1xf32>
    %199 = vector.broadcast %198 : vector<8x1xf32> to vector<8x128xf32>
    %200 = arith.mulf %199, %30 : vector<8x128xf32>
    %201 = vector.extract_strided_slice %172 {offsets = [0, 8], sizes = [8, 1], strides = [1, 1]} : vector<8x128xf32> to vector<8x1xf32>
    %202 = vector.broadcast %201 : vector<8x1xf32> to vector<8x128xf32>
    %203 = arith.mulf %202, %33 : vector<8x128xf32>
    %204 = vector.extract_strided_slice %172 {offsets = [0, 9], sizes = [8, 1], strides = [1, 1]} : vector<8x128xf32> to vector<8x1xf32>
    %205 = vector.broadcast %204 : vector<8x1xf32> to vector<8x128xf32>
    %206 = arith.mulf %205, %36 : vector<8x128xf32>
    %207 = arith.addf %179, %182 : vector<8x128xf32>
    %208 = arith.addf %185, %188 : vector<8x128xf32>
    %209 = arith.addf %191, %194 : vector<8x128xf32>
    %210 = arith.addf %197, %200 : vector<8x128xf32>
    %211 = arith.addf %203, %206 : vector<8x128xf32>
    %212 = arith.addf %207, %208 : vector<8x128xf32>
    %213 = arith.addf %209, %210 : vector<8x128xf32>
    %214 = arith.addf %212, %213 : vector<8x128xf32>
    %215 = arith.addf %214, %211 : vector<8x128xf32>
    %216 = arith.addf %176, %215 : vector<8x128xf32>
    %217 = math.tanh %216 : vector<8x128xf32>
    %218 = vector.extract_strided_slice %0 {offsets = [0, 4], sizes = [8, 1], strides = [1, 1]} : vector<8x128xf32> to vector<8x1xf32>
    %219 = vector.broadcast %218 : vector<8x1xf32> to vector<8x128xf32>
    %220 = arith.mulf %219, %3 : vector<8x128xf32>
    %221 = arith.addf %220, %6 : vector<8x128xf32>
    %222 = vector.extract_strided_slice %217 {offsets = [0, 0], sizes = [8, 1], strides = [1, 1]} : vector<8x128xf32> to vector<8x1xf32>
    %223 = vector.broadcast %222 : vector<8x1xf32> to vector<8x128xf32>
    %224 = arith.mulf %223, %9 : vector<8x128xf32>
    %225 = vector.extract_strided_slice %217 {offsets = [0, 1], sizes = [8, 1], strides = [1, 1]} : vector<8x128xf32> to vector<8x1xf32>
    %226 = vector.broadcast %225 : vector<8x1xf32> to vector<8x128xf32>
    %227 = arith.mulf %226, %12 : vector<8x128xf32>
    %228 = vector.extract_strided_slice %217 {offsets = [0, 2], sizes = [8, 1], strides = [1, 1]} : vector<8x128xf32> to vector<8x1xf32>
    %229 = vector.broadcast %228 : vector<8x1xf32> to vector<8x128xf32>
    %230 = arith.mulf %229, %15 : vector<8x128xf32>
    %231 = vector.extract_strided_slice %217 {offsets = [0, 3], sizes = [8, 1], strides = [1, 1]} : vector<8x128xf32> to vector<8x1xf32>
    %232 = vector.broadcast %231 : vector<8x1xf32> to vector<8x128xf32>
    %233 = arith.mulf %232, %18 : vector<8x128xf32>
    %234 = vector.extract_strided_slice %217 {offsets = [0, 4], sizes = [8, 1], strides = [1, 1]} : vector<8x128xf32> to vector<8x1xf32>
    %235 = vector.broadcast %234 : vector<8x1xf32> to vector<8x128xf32>
    %236 = arith.mulf %235, %21 : vector<8x128xf32>
    %237 = vector.extract_strided_slice %217 {offsets = [0, 5], sizes = [8, 1], strides = [1, 1]} : vector<8x128xf32> to vector<8x1xf32>
    %238 = vector.broadcast %237 : vector<8x1xf32> to vector<8x128xf32>
    %239 = arith.mulf %238, %24 : vector<8x128xf32>
    %240 = vector.extract_strided_slice %217 {offsets = [0, 6], sizes = [8, 1], strides = [1, 1]} : vector<8x128xf32> to vector<8x1xf32>
    %241 = vector.broadcast %240 : vector<8x1xf32> to vector<8x128xf32>
    %242 = arith.mulf %241, %27 : vector<8x128xf32>
    %243 = vector.extract_strided_slice %217 {offsets = [0, 7], sizes = [8, 1], strides = [1, 1]} : vector<8x128xf32> to vector<8x1xf32>
    %244 = vector.broadcast %243 : vector<8x1xf32> to vector<8x128xf32>
    %245 = arith.mulf %244, %30 : vector<8x128xf32>
    %246 = vector.extract_strided_slice %217 {offsets = [0, 8], sizes = [8, 1], strides = [1, 1]} : vector<8x128xf32> to vector<8x1xf32>
    %247 = vector.broadcast %246 : vector<8x1xf32> to vector<8x128xf32>
    %248 = arith.mulf %247, %33 : vector<8x128xf32>
    %249 = vector.extract_strided_slice %217 {offsets = [0, 9], sizes = [8, 1], strides = [1, 1]} : vector<8x128xf32> to vector<8x1xf32>
    %250 = vector.broadcast %249 : vector<8x1xf32> to vector<8x128xf32>
    %251 = arith.mulf %250, %36 : vector<8x128xf32>
    %252 = arith.addf %224, %227 : vector<8x128xf32>
    %253 = arith.addf %230, %233 : vector<8x128xf32>
    %254 = arith.addf %236, %239 : vector<8x128xf32>
    %255 = arith.addf %242, %245 : vector<8x128xf32>
    %256 = arith.addf %248, %251 : vector<8x128xf32>
    %257 = arith.addf %252, %253 : vector<8x128xf32>
    %258 = arith.addf %254, %255 : vector<8x128xf32>
    %259 = arith.addf %257, %258 : vector<8x128xf32>
    %260 = arith.addf %259, %256 : vector<8x128xf32>
    %261 = arith.addf %221, %260 : vector<8x128xf32>
    %262 = math.tanh %261 : vector<8x128xf32>
    %263 = vector.extract_strided_slice %0 {offsets = [0, 5], sizes = [8, 1], strides = [1, 1]} : vector<8x128xf32> to vector<8x1xf32>
    %264 = vector.broadcast %263 : vector<8x1xf32> to vector<8x128xf32>
    %265 = arith.mulf %264, %3 : vector<8x128xf32>
    %266 = arith.addf %265, %6 : vector<8x128xf32>
    %267 = vector.extract_strided_slice %262 {offsets = [0, 0], sizes = [8, 1], strides = [1, 1]} : vector<8x128xf32> to vector<8x1xf32>
    %268 = vector.broadcast %267 : vector<8x1xf32> to vector<8x128xf32>
    %269 = arith.mulf %268, %9 : vector<8x128xf32>
    %270 = vector.extract_strided_slice %262 {offsets = [0, 1], sizes = [8, 1], strides = [1, 1]} : vector<8x128xf32> to vector<8x1xf32>
    %271 = vector.broadcast %270 : vector<8x1xf32> to vector<8x128xf32>
    %272 = arith.mulf %271, %12 : vector<8x128xf32>
    %273 = vector.extract_strided_slice %262 {offsets = [0, 2], sizes = [8, 1], strides = [1, 1]} : vector<8x128xf32> to vector<8x1xf32>
    %274 = vector.broadcast %273 : vector<8x1xf32> to vector<8x128xf32>
    %275 = arith.mulf %274, %15 : vector<8x128xf32>
    %276 = vector.extract_strided_slice %262 {offsets = [0, 3], sizes = [8, 1], strides = [1, 1]} : vector<8x128xf32> to vector<8x1xf32>
    %277 = vector.broadcast %276 : vector<8x1xf32> to vector<8x128xf32>
    %278 = arith.mulf %277, %18 : vector<8x128xf32>
    %279 = vector.extract_strided_slice %262 {offsets = [0, 4], sizes = [8, 1], strides = [1, 1]} : vector<8x128xf32> to vector<8x1xf32>
    %280 = vector.broadcast %279 : vector<8x1xf32> to vector<8x128xf32>
    %281 = arith.mulf %280, %21 : vector<8x128xf32>
    %282 = vector.extract_strided_slice %262 {offsets = [0, 5], sizes = [8, 1], strides = [1, 1]} : vector<8x128xf32> to vector<8x1xf32>
    %283 = vector.broadcast %282 : vector<8x1xf32> to vector<8x128xf32>
    %284 = arith.mulf %283, %24 : vector<8x128xf32>
    %285 = vector.extract_strided_slice %262 {offsets = [0, 6], sizes = [8, 1], strides = [1, 1]} : vector<8x128xf32> to vector<8x1xf32>
    %286 = vector.broadcast %285 : vector<8x1xf32> to vector<8x128xf32>
    %287 = arith.mulf %286, %27 : vector<8x128xf32>
    %288 = vector.extract_strided_slice %262 {offsets = [0, 7], sizes = [8, 1], strides = [1, 1]} : vector<8x128xf32> to vector<8x1xf32>
    %289 = vector.broadcast %288 : vector<8x1xf32> to vector<8x128xf32>
    %290 = arith.mulf %289, %30 : vector<8x128xf32>
    %291 = vector.extract_strided_slice %262 {offsets = [0, 8], sizes = [8, 1], strides = [1, 1]} : vector<8x128xf32> to vector<8x1xf32>
    %292 = vector.broadcast %291 : vector<8x1xf32> to vector<8x128xf32>
    %293 = arith.mulf %292, %33 : vector<8x128xf32>
    %294 = vector.extract_strided_slice %262 {offsets = [0, 9], sizes = [8, 1], strides = [1, 1]} : vector<8x128xf32> to vector<8x1xf32>
    %295 = vector.broadcast %294 : vector<8x1xf32> to vector<8x128xf32>
    %296 = arith.mulf %295, %36 : vector<8x128xf32>
    %297 = arith.addf %269, %272 : vector<8x128xf32>
    %298 = arith.addf %275, %278 : vector<8x128xf32>
    %299 = arith.addf %281, %284 : vector<8x128xf32>
    %300 = arith.addf %287, %290 : vector<8x128xf32>
    %301 = arith.addf %293, %296 : vector<8x128xf32>
    %302 = arith.addf %297, %298 : vector<8x128xf32>
    %303 = arith.addf %299, %300 : vector<8x128xf32>
    %304 = arith.addf %302, %303 : vector<8x128xf32>
    %305 = arith.addf %304, %301 : vector<8x128xf32>
    %306 = arith.addf %266, %305 : vector<8x128xf32>
    %307 = math.tanh %306 : vector<8x128xf32>
    %308 = vector.extract_strided_slice %0 {offsets = [0, 6], sizes = [8, 1], strides = [1, 1]} : vector<8x128xf32> to vector<8x1xf32>
    %309 = vector.broadcast %308 : vector<8x1xf32> to vector<8x128xf32>
    %310 = arith.mulf %309, %3 : vector<8x128xf32>
    %311 = arith.addf %310, %6 : vector<8x128xf32>
    %312 = vector.extract_strided_slice %307 {offsets = [0, 0], sizes = [8, 1], strides = [1, 1]} : vector<8x128xf32> to vector<8x1xf32>
    %313 = vector.broadcast %312 : vector<8x1xf32> to vector<8x128xf32>
    %314 = arith.mulf %313, %9 : vector<8x128xf32>
    %315 = vector.extract_strided_slice %307 {offsets = [0, 1], sizes = [8, 1], strides = [1, 1]} : vector<8x128xf32> to vector<8x1xf32>
    %316 = vector.broadcast %315 : vector<8x1xf32> to vector<8x128xf32>
    %317 = arith.mulf %316, %12 : vector<8x128xf32>
    %318 = vector.extract_strided_slice %307 {offsets = [0, 2], sizes = [8, 1], strides = [1, 1]} : vector<8x128xf32> to vector<8x1xf32>
    %319 = vector.broadcast %318 : vector<8x1xf32> to vector<8x128xf32>
    %320 = arith.mulf %319, %15 : vector<8x128xf32>
    %321 = vector.extract_strided_slice %307 {offsets = [0, 3], sizes = [8, 1], strides = [1, 1]} : vector<8x128xf32> to vector<8x1xf32>
    %322 = vector.broadcast %321 : vector<8x1xf32> to vector<8x128xf32>
    %323 = arith.mulf %322, %18 : vector<8x128xf32>
    %324 = vector.extract_strided_slice %307 {offsets = [0, 4], sizes = [8, 1], strides = [1, 1]} : vector<8x128xf32> to vector<8x1xf32>
    %325 = vector.broadcast %324 : vector<8x1xf32> to vector<8x128xf32>
    %326 = arith.mulf %325, %21 : vector<8x128xf32>
    %327 = vector.extract_strided_slice %307 {offsets = [0, 5], sizes = [8, 1], strides = [1, 1]} : vector<8x128xf32> to vector<8x1xf32>
    %328 = vector.broadcast %327 : vector<8x1xf32> to vector<8x128xf32>
    %329 = arith.mulf %328, %24 : vector<8x128xf32>
    %330 = vector.extract_strided_slice %307 {offsets = [0, 6], sizes = [8, 1], strides = [1, 1]} : vector<8x128xf32> to vector<8x1xf32>
    %331 = vector.broadcast %330 : vector<8x1xf32> to vector<8x128xf32>
    %332 = arith.mulf %331, %27 : vector<8x128xf32>
    %333 = vector.extract_strided_slice %307 {offsets = [0, 7], sizes = [8, 1], strides = [1, 1]} : vector<8x128xf32> to vector<8x1xf32>
    %334 = vector.broadcast %333 : vector<8x1xf32> to vector<8x128xf32>
    %335 = arith.mulf %334, %30 : vector<8x128xf32>
    %336 = vector.extract_strided_slice %307 {offsets = [0, 8], sizes = [8, 1], strides = [1, 1]} : vector<8x128xf32> to vector<8x1xf32>
    %337 = vector.broadcast %336 : vector<8x1xf32> to vector<8x128xf32>
    %338 = arith.mulf %337, %33 : vector<8x128xf32>
    %339 = vector.extract_strided_slice %307 {offsets = [0, 9], sizes = [8, 1], strides = [1, 1]} : vector<8x128xf32> to vector<8x1xf32>
    %340 = vector.broadcast %339 : vector<8x1xf32> to vector<8x128xf32>
    %341 = arith.mulf %340, %36 : vector<8x128xf32>
    %342 = arith.addf %314, %317 : vector<8x128xf32>
    %343 = arith.addf %320, %323 : vector<8x128xf32>
    %344 = arith.addf %326, %329 : vector<8x128xf32>
    %345 = arith.addf %332, %335 : vector<8x128xf32>
    %346 = arith.addf %338, %341 : vector<8x128xf32>
    %347 = arith.addf %342, %343 : vector<8x128xf32>
    %348 = arith.addf %344, %345 : vector<8x128xf32>
    %349 = arith.addf %347, %348 : vector<8x128xf32>
    %350 = arith.addf %349, %346 : vector<8x128xf32>
    %351 = arith.addf %311, %350 : vector<8x128xf32>
    %352 = math.tanh %351 : vector<8x128xf32>
    %353 = vector.extract_strided_slice %0 {offsets = [0, 7], sizes = [8, 1], strides = [1, 1]} : vector<8x128xf32> to vector<8x1xf32>
    %354 = vector.broadcast %353 : vector<8x1xf32> to vector<8x128xf32>
    %355 = arith.mulf %354, %3 : vector<8x128xf32>
    %356 = arith.addf %355, %6 : vector<8x128xf32>
    %357 = vector.extract_strided_slice %352 {offsets = [0, 0], sizes = [8, 1], strides = [1, 1]} : vector<8x128xf32> to vector<8x1xf32>
    %358 = vector.broadcast %357 : vector<8x1xf32> to vector<8x128xf32>
    %359 = arith.mulf %358, %9 : vector<8x128xf32>
    %360 = vector.extract_strided_slice %352 {offsets = [0, 1], sizes = [8, 1], strides = [1, 1]} : vector<8x128xf32> to vector<8x1xf32>
    %361 = vector.broadcast %360 : vector<8x1xf32> to vector<8x128xf32>
    %362 = arith.mulf %361, %12 : vector<8x128xf32>
    %363 = vector.extract_strided_slice %352 {offsets = [0, 2], sizes = [8, 1], strides = [1, 1]} : vector<8x128xf32> to vector<8x1xf32>
    %364 = vector.broadcast %363 : vector<8x1xf32> to vector<8x128xf32>
    %365 = arith.mulf %364, %15 : vector<8x128xf32>
    %366 = vector.extract_strided_slice %352 {offsets = [0, 3], sizes = [8, 1], strides = [1, 1]} : vector<8x128xf32> to vector<8x1xf32>
    %367 = vector.broadcast %366 : vector<8x1xf32> to vector<8x128xf32>
    %368 = arith.mulf %367, %18 : vector<8x128xf32>
    %369 = vector.extract_strided_slice %352 {offsets = [0, 4], sizes = [8, 1], strides = [1, 1]} : vector<8x128xf32> to vector<8x1xf32>
    %370 = vector.broadcast %369 : vector<8x1xf32> to vector<8x128xf32>
    %371 = arith.mulf %370, %21 : vector<8x128xf32>
    %372 = vector.extract_strided_slice %352 {offsets = [0, 5], sizes = [8, 1], strides = [1, 1]} : vector<8x128xf32> to vector<8x1xf32>
    %373 = vector.broadcast %372 : vector<8x1xf32> to vector<8x128xf32>
    %374 = arith.mulf %373, %24 : vector<8x128xf32>
    %375 = vector.extract_strided_slice %352 {offsets = [0, 6], sizes = [8, 1], strides = [1, 1]} : vector<8x128xf32> to vector<8x1xf32>
    %376 = vector.broadcast %375 : vector<8x1xf32> to vector<8x128xf32>
    %377 = arith.mulf %376, %27 : vector<8x128xf32>
    %378 = vector.extract_strided_slice %352 {offsets = [0, 7], sizes = [8, 1], strides = [1, 1]} : vector<8x128xf32> to vector<8x1xf32>
    %379 = vector.broadcast %378 : vector<8x1xf32> to vector<8x128xf32>
    %380 = arith.mulf %379, %30 : vector<8x128xf32>
    %381 = vector.extract_strided_slice %352 {offsets = [0, 8], sizes = [8, 1], strides = [1, 1]} : vector<8x128xf32> to vector<8x1xf32>
    %382 = vector.broadcast %381 : vector<8x1xf32> to vector<8x128xf32>
    %383 = arith.mulf %382, %33 : vector<8x128xf32>
    %384 = vector.extract_strided_slice %352 {offsets = [0, 9], sizes = [8, 1], strides = [1, 1]} : vector<8x128xf32> to vector<8x1xf32>
    %385 = vector.broadcast %384 : vector<8x1xf32> to vector<8x128xf32>
    %386 = arith.mulf %385, %36 : vector<8x128xf32>
    %387 = arith.addf %359, %362 : vector<8x128xf32>
    %388 = arith.addf %365, %368 : vector<8x128xf32>
    %389 = arith.addf %371, %374 : vector<8x128xf32>
    %390 = arith.addf %377, %380 : vector<8x128xf32>
    %391 = arith.addf %383, %386 : vector<8x128xf32>
    %392 = arith.addf %387, %388 : vector<8x128xf32>
    %393 = arith.addf %389, %390 : vector<8x128xf32>
    %394 = arith.addf %392, %393 : vector<8x128xf32>
    %395 = arith.addf %394, %391 : vector<8x128xf32>
    %396 = arith.addf %356, %395 : vector<8x128xf32>
    %397 = math.tanh %396 : vector<8x128xf32>
    %c0_16 = arith.constant 0 : index
    %c0_17 = arith.constant 0 : index
    %398 = vector.load %arg4[%c0_16, %c0_17] : memref<128x128xf32, #tpu.memory_space<vmem>>, vector<128x128xf32>
    %cst_18 = arith.constant dense<0.000000e+00> : vector<8x128xf32>
    %399 = tpu.matmul %397, %398, %cst_18 {dimension_numbers = #tpu.dot_dimension_numbers<[1], [0], [0], [1], [0, 0, 1, 1], [], []>} : vector<8x128xf32>, vector<128x128xf32>, vector<8x128xf32> -> vector<8x128xf32>
    %c0_19 = arith.constant 0 : index
    %c0_20 = arith.constant 0 : index
    %400 = vector.load %arg5[%c0_19, %c0_20] : memref<1x128xf32, #tpu.memory_space<vmem>>, vector<1x128xf32>
    %401 = vector.broadcast %400 : vector<1x128xf32> to vector<8x128xf32>
    %402 = arith.addf %399, %401 : vector<8x128xf32>
    %c0_21 = arith.constant 0 : index
    %c0_22 = arith.constant 0 : index
    %403 = vector.load %arg6[%c0_21, %c0_22] : memref<8x128xf32, #tpu.memory_space<vmem>>, vector<8x128xf32>
    tpu.vector_store %arg6[%c0_21, %c0_22], %402 {strides = array<i32>} : memref<8x128xf32, #tpu.memory_space<vmem>>, vector<8x128xf32>,
    return
  }
}

</mosaic_0001>

<llo_original>
// kernel: simple_rnn_forward.1
$region0: #{simple_rnn_forward.1}
  #allocation0 [shape = 'u32[]', space=smem, size = 0x4, offset = 0x4, fixed_abs, tag = 'smem constant byte address 0x4 - core index']
  #allocation1 [shape = 'u32[72,128]{1,0:T(1,128)}', space=vmem, size = 0x9000, scoped, tag = 'internal scratch']
  %s0 = inlined_call_operand.vmem [shape: f32[8,128], index: 0, kind: input, shape index: {}]
  %s1 = inlined_call_operand.vmem [shape: f32[1,128], index: 1, kind: input, shape index: {}]
  %s2 = inlined_call_operand.hbm [shape: f32[128,128], index: 2, kind: input, shape index: {}]
  %s3 = inlined_call_operand.vmem [shape: f32[1,128], index: 3, kind: input, shape index: {}]
  %s4 = inlined_call_operand.hbm [shape: f32[128,128], index: 4, kind: input, shape index: {}]
  %s5 = inlined_call_operand.vmem [shape: f32[1,128], index: 5, kind: input, shape index: {}]
  %s6 = inlined_call_operand.vmem [shape: f32[8,128], index: 6, kind: output, shape index: {}]
  %s7 = sld [smem:[#allocation0]]
  $region42: #{simple_rnn_forward.1} parent=0
    _
  %s9 = ssub.s32 1, %s7
  %s10 = scalar_select 0, %s9, %s7
  $region1: #{simple_rnn_forward.1} parent=0
    #allocation2 [shape = 'u8[65536]{0}', space=vmem, size = 0x10000, scoped, tag = 'input window, operand 2, single buffered']
    #allocation3 [shape = 's32[1]{0}', space=sflag, size = 0x4, scoped, tag = 'scoped memory for simple_rnn_forward.1']
    #allocation4 [shape = 'u8[65536]{0}', space=vmem, size = 0x10000, scoped, tag = 'input window, operand 4, single buffered']
    #allocation5 [shape = 's32[1]{0}', space=sflag, size = 0x4, scoped, tag = 'scoped memory for simple_rnn_forward.1']
    %11 = vsyncpa [#allocation3], 0
    %12 = vsyncpa [#allocation5], 0
    // Predicated region
    $region2: #{simple_rnn_forward.1} parent=1 // pred_check
      _
    $region3: #{simple_rnn_forward.1} parent=1 // pred_check_branch
      %14 = sbr.rel (0) target = $region5
    $region4: #{simple_rnn_forward.1} parent=1 // pred_region
      _
    $region5: #{simple_rnn_forward.1} parent=1 // pred_fallthru
      _
    // Predicated region
    $region6: #{simple_rnn_forward.1} parent=1 // pred_check
      _
    $region7: #{simple_rnn_forward.1} parent=1 // pred_check_branch
      %16 = sbr.rel (0) target = $region9
    $region8: #{simple_rnn_forward.1} parent=1 // pred_region
      _
    $region9: #{simple_rnn_forward.1} parent=1 // pred_fallthru
      _
    // Predicated region
    $region10: #{simple_rnn_forward.1} parent=1 // pred_check
      _
    $region11: #{simple_rnn_forward.1} parent=1 // pred_check_branch
      %18 = sbr.rel (0) target = $region13
    $region12: #{simple_rnn_forward.1} parent=1 // pred_region
      %20 = vsyncadd [#allocation3], 0
      %s21 = sshll.u32 %s2, 4
      %s22 = int_to_ptr.hbm [resolvable:$true] %s21
      %s23 = sshll.u32 [#allocation2], 4
      %s24 = int_to_ptr.vmem [resolvable:$true] %s23
      %29 = dma.hbm_to_vmem [thread:$0]  %s22, 2048, %s24, [#allocation3], 128, 128, 8
    $region13: #{simple_rnn_forward.1} parent=1 // pred_fallthru
      _
    // Predicated region
    $region14: #{simple_rnn_forward.1} parent=1 // pred_check
      _
    $region15: #{simple_rnn_forward.1} parent=1 // pred_check_branch
      %31 = sbr.rel (0) target = $region17
    $region16: #{simple_rnn_forward.1} parent=1 // pred_region
      _
    $region17: #{simple_rnn_forward.1} parent=1 // pred_fallthru
      _
    // Predicated region
    $region18: #{simple_rnn_forward.1} parent=1 // pred_check
      _
    $region19: #{simple_rnn_forward.1} parent=1 // pred_check_branch
      %33 = sbr.rel (0) target = $region21
    $region20: #{simple_rnn_forward.1} parent=1 // pred_region
      %35 = vsyncadd [#allocation5], 0
      %s36 = sshll.u32 %s4, 4
      %s37 = int_to_ptr.hbm [resolvable:$true] %s36
      %s38 = sshll.u32 [#allocation4], 4
      %s39 = int_to_ptr.vmem [resolvable:$true] %s38
      %44 = dma.hbm_to_vmem [thread:$0]  %s37, 2048, %s39, [#allocation5], 128, 128, 8
    $region21: #{simple_rnn_forward.1} parent=1 // pred_fallthru
      _
    // Predicated region
    $region22: #{simple_rnn_forward.1} parent=1 // pred_check
      _
    $region23: #{simple_rnn_forward.1} parent=1 // pred_check_branch
      %46 = sbr.rel (0) target = $region25
    $region24: #{simple_rnn_forward.1} parent=1 // pred_region
      _
    $region25: #{simple_rnn_forward.1} parent=1 // pred_fallthru
      _
    // Predicated region
    $region26: #{simple_rnn_forward.1} parent=1 // pred_check
      _
    $region27: #{simple_rnn_forward.1} parent=1 // pred_check_branch
      %48 = sbr.rel (0) target = $region29
    $region28: #{simple_rnn_forward.1} parent=1 // pred_region
      %50 = dma.done [#allocation3], 2048
    $region29: #{simple_rnn_forward.1} parent=1 // pred_fallthru
      _
    // Predicated region
    $region30: #{simple_rnn_forward.1} parent=1 // pred_check
      _
    $region31: #{simple_rnn_forward.1} parent=1 // pred_check_branch
      %52 = sbr.rel (0) target = $region33
    $region32: #{simple_rnn_forward.1} parent=1 // pred_region
      %54 = dma.done [#allocation5], 2048
    $region33: #{simple_rnn_forward.1} parent=1 // pred_fallthru
      _
    %v55 = vld [vmem:[%s0] sm:$0xff]
    %v56 = vld [vmem:[%s1] sm:$0x1]
    %v58 = vperm.slane %v56, 0
    %v60 = vld [vmem:[%s3] sm:$0x1]
    %v62 = vperm.slane %v60, 0
    %v64 = vld [vmem:[#allocation2] sm:$0x1]
    %v65 = vperm.slane %v64, 0
    %v66 = vld [vmem:[#allocation2 + $0x1] sm:$0x1]
    %v67 = vperm.slane %v66, 0
    %v68 = vld [vmem:[#allocation2 + $0x2] sm:$0x1]
    %v69 = vperm.slane %v68, 0
    %v70 = vld [vmem:[#allocation2 + $0x3] sm:$0x1]
    %v71 = vperm.slane %v70, 0
    %v72 = vld [vmem:[#allocation2 + $0x4] sm:$0x1]
    %v73 = vperm.slane %v72, 0
    %v74 = vld [vmem:[#allocation2 + $0x5] sm:$0x1]
    %v75 = vperm.slane %v74, 0
    %v76 = vld [vmem:[#allocation2 + $0x6] sm:$0x1]
    %v77 = vperm.slane %v76, 0
    %v78 = vld [vmem:[#allocation2 + $0x7] sm:$0x1]
    %v79 = vperm.slane %v78, 0
    %v80 = vld [vmem:[#allocation2 + $0x8] sm:$0x1]
    %v81 = vperm.slane %v80, 0
    %v82 = vld [vmem:[#allocation2 + $0x9] sm:$0x1]
    %v83 = vperm.slane %v82, 0
    %85 = vset.pattern.permute.xlu0 0
    %86 = vperm.xlu0 %85, %v55
    %v87 = vpop.permute.xlu0 %86
    %v89 = vmul.f32 %v87, %v58
    %v90 = vadd.f32 %v89, %v62
    %v91 = vmul.f32 %v65, 0.0
    %v92 = vmul.f32 %v67, 0.0
    %v93 = vmul.f32 %v69, 0.0
    %v94 = vmul.f32 %v71, 0.0
    %v95 = vmul.f32 %v73, 0.0
    %v96 = vmul.f32 %v75, 0.0
    %v97 = vmul.f32 %v77, 0.0
    %v98 = vmul.f32 %v79, 0.0
    %v99 = vmul.f32 %v81, 0.0
    %v100 = vmul.f32 %v83, 0.0
    %v101 = vadd.f32 %v91, %v92
    %v102 = vadd.f32 %v93, %v94
    %v103 = vadd.f32 %v95, %v96
    %v104 = vadd.f32 %v97, %v98
    %v105 = vadd.f32 %v99, %v100
    %v106 = vadd.f32 %v101, %v102
    %v107 = vadd.f32 %v103, %v104
    %v108 = vadd.f32 %v106, %v107
    %v109 = vadd.f32 %v108, %v105
    %v110 = vadd.f32 %v90, %v109
    %v111 = vtanh.pop %v110
    %112 = vset.pattern.permute.xlu0 1
    %113 = vperm.xlu0 %112, %v55
    %v114 = vpop.permute.xlu0 %113
    %v116 = vmul.f32 %v114, %v58
    %v117 = vadd.f32 %v116, %v62
    %119 = vset.pattern.permute.xlu0 0
    %120 = vperm.xlu0 %119, %v111
    %v121 = vpop.permute.xlu0 %120
    %v123 = vmul.f32 %v121, %v65
    %124 = vset.pattern.permute.xlu0 1
    %125 = vperm.xlu0 %124, %v111
    %v126 = vpop.permute.xlu0 %125
    %v128 = vmul.f32 %v126, %v67
    %129 = vset.pattern.permute.xlu0 2
    %130 = vperm.xlu0 %129, %v111
    %v131 = vpop.permute.xlu0 %130
    %v133 = vmul.f32 %v131, %v69
    %134 = vset.pattern.permute.xlu0 3
    %135 = vperm.xlu0 %134, %v111
    %v136 = vpop.permute.xlu0 %135
    %v138 = vmul.f32 %v136, %v71
    %139 = vset.pattern.permute.xlu0 4
    %140 = vperm.xlu0 %139, %v111
    %v141 = vpop.permute.xlu0 %140
    %v143 = vmul.f32 %v141, %v73
    %144 = vset.pattern.permute.xlu0 5
    %145 = vperm.xlu0 %144, %v111
    %v146 = vpop.permute.xlu0 %145
    %v148 = vmul.f32 %v146, %v75
    %149 = vset.pattern.permute.xlu0 6
    %150 = vperm.xlu0 %149, %v111
    %v151 = vpop.permute.xlu0 %150
    %v153 = vmul.f32 %v151, %v77
    %154 = vset.pattern.permute.xlu0 7
    %155 = vperm.xlu0 %154, %v111
    %v156 = vpop.permute.xlu0 %155
    %v158 = vmul.f32 %v156, %v79
    %159 = vset.pattern.permute.xlu0 8
    %160 = vperm.xlu0 %159, %v111
    %v161 = vpop.permute.xlu0 %160
    %v163 = vmul.f32 %v161, %v81
    %164 = vset.pattern.permute.xlu0 9
    %165 = vperm.xlu0 %164, %v111
    %v166 = vpop.permute.xlu0 %165
    %v168 = vmul.f32 %v166, %v83
    %v169 = vadd.f32 %v123, %v128
    %v170 = vadd.f32 %v133, %v138
    %v171 = vadd.f32 %v143, %v148
    %v172 = vadd.f32 %v153, %v158
    %v173 = vadd.f32 %v163, %v168
    %v174 = vadd.f32 %v169, %v170
    %v175 = vadd.f32 %v171, %v172
    %v176 = vadd.f32 %v174, %v175
    %v177 = vadd.f32 %v176, %v173
    %v178 = vadd.f32 %v117, %v177
    %v179 = vtanh.pop %v178
    %180 = vset.pattern.permute.xlu0 2
    %181 = vperm.xlu0 %180, %v55
    %v182 = vpop.permute.xlu0 %181
    %v184 = vmul.f32 %v182, %v58
    %v185 = vadd.f32 %v184, %v62
    %187 = vset.pattern.permute.xlu0 0
    %188 = vperm.xlu0 %187, %v179
    %v189 = vpop.permute.xlu0 %188
    %v191 = vmul.f32 %v189, %v65
    %192 = vset.pattern.permute.xlu0 1
    %193 = vperm.xlu0 %192, %v179
    %v194 = vpop.permute.xlu0 %193
    %v196 = vmul.f32 %v194, %v67
    %197 = vset.pattern.permute.xlu0 2
    %198 = vperm.xlu0 %197, %v179
    %v199 = vpop.permute.xlu0 %198
    %v201 = vmul.f32 %v199, %v69
    %202 = vset.pattern.permute.xlu0 3
    %203 = vperm.xlu0 %202, %v179
    %v204 = vpop.permute.xlu0 %203
    %v206 = vmul.f32 %v204, %v71
    %207 = vset.pattern.permute.xlu0 4
    %208 = vperm.xlu0 %207, %v179
    %v209 = vpop.permute.xlu0 %208
    %v211 = vmul.f32 %v209, %v73
    %212 = vset.pattern.permute.xlu0 5
    %213 = vperm.xlu0 %212, %v179
    %v214 = vpop.permute.xlu0 %213
    %v216 = vmul.f32 %v214, %v75
    %217 = vset.pattern.permute.xlu0 6
    %218 = vperm.xlu0 %217, %v179
    %v219 = vpop.permute.xlu0 %218
    %v221 = vmul.f32 %v219, %v77
    %222 = vset.pattern.permute.xlu0 7
    %223 = vperm.xlu0 %222, %v179
    %v224 = vpop.permute.xlu0 %223
    %v226 = vmul.f32 %v224, %v79
    %227 = vset.pattern.permute.xlu0 8
    %228 = vperm.xlu0 %227, %v179
    %v229 = vpop.permute.xlu0 %228
    %v231 = vmul.f32 %v229, %v81
    %232 = vset.pattern.permute.xlu0 9
    %233 = vperm.xlu0 %232, %v179
    %v234 = vpop.permute.xlu0 %233
    %v236 = vmul.f32 %v234, %v83
    %v237 = vadd.f32 %v191, %v196
    %v238 = vadd.f32 %v201, %v206
    %v239 = vadd.f32 %v211, %v216
    %v240 = vadd.f32 %v221, %v226
    %v241 = vadd.f32 %v231, %v236
    %v242 = vadd.f32 %v237, %v238
    %v243 = vadd.f32 %v239, %v240
    %v244 = vadd.f32 %v242, %v243
    %v245 = vadd.f32 %v244, %v241
    %v246 = vadd.f32 %v185, %v245
    %v247 = vtanh.pop %v246
    %248 = vset.pattern.permute.xlu0 3
    %249 = vperm.xlu0 %248, %v55
    %v250 = vpop.permute.xlu0 %249
    %v252 = vmul.f32 %v250, %v58
    %v253 = vadd.f32 %v252, %v62
    %255 = vset.pattern.permute.xlu0 0
    %256 = vperm.xlu0 %255, %v247
    %v257 = vpop.permute.xlu0 %256
    %v259 = vmul.f32 %v257, %v65
    %260 = vset.pattern.permute.xlu0 1
    %261 = vperm.xlu0 %260, %v247
    %v262 = vpop.permute.xlu0 %261
    %v264 = vmul.f32 %v262, %v67
    %265 = vset.pattern.permute.xlu0 2
    %266 = vperm.xlu0 %265, %v247
    %v267 = vpop.permute.xlu0 %266
    %v269 = vmul.f32 %v267, %v69
    %270 = vset.pattern.permute.xlu0 3
    %271 = vperm.xlu0 %270, %v247
    %v272 = vpop.permute.xlu0 %271
    %v274 = vmul.f32 %v272, %v71
    %275 = vset.pattern.permute.xlu0 4
    %276 = vperm.xlu0 %275, %v247
    %v277 = vpop.permute.xlu0 %276
    %v279 = vmul.f32 %v277, %v73
    %280 = vset.pattern.permute.xlu0 5
    %281 = vperm.xlu0 %280, %v247
    %v282 = vpop.permute.xlu0 %281
    %v284 = vmul.f32 %v282, %v75
    %285 = vset.pattern.permute.xlu0 6
    %286 = vperm.xlu0 %285, %v247
    %v287 = vpop.permute.xlu0 %286
    %v289 = vmul.f32 %v287, %v77
    %290 = vset.pattern.permute.xlu0 7
    %291 = vperm.xlu0 %290, %v247
    %v292 = vpop.permute.xlu0 %291
    %v294 = vmul.f32 %v292, %v79
    %295 = vset.pattern.permute.xlu0 8
    %296 = vperm.xlu0 %295, %v247
    %v297 = vpop.permute.xlu0 %296
    %v299 = vmul.f32 %v297, %v81
    %300 = vset.pattern.permute.xlu0 9
    %301 = vperm.xlu0 %300, %v247
    %v302 = vpop.permute.xlu0 %301
    %v304 = vmul.f32 %v302, %v83
    %v305 = vadd.f32 %v259, %v264
    %v306 = vadd.f32 %v269, %v274
    %v307 = vadd.f32 %v279, %v284
    %v308 = vadd.f32 %v289, %v294
    %v309 = vadd.f32 %v299, %v304
    %v310 = vadd.f32 %v305, %v306
    %v311 = vadd.f32 %v307, %v308
    %v312 = vadd.f32 %v310, %v311
    %v313 = vadd.f32 %v312, %v309
    %v314 = vadd.f32 %v253, %v313
    %v315 = vtanh.pop %v314
    %316 = vset.pattern.permute.xlu0 4
    %317 = vperm.xlu0 %316, %v55
    %v318 = vpop.permute.xlu0 %317
    %v320 = vmul.f32 %v318, %v58
    %v321 = vadd.f32 %v320, %v62
    %323 = vset.pattern.permute.xlu0 0
    %324 = vperm.xlu0 %323, %v315
    %v325 = vpop.permute.xlu0 %324
    %v327 = vmul.f32 %v325, %v65
    %328 = vset.pattern.permute.xlu0 1
    %329 = vperm.xlu0 %328, %v315
    %v330 = vpop.permute.xlu0 %329
    %v332 = vmul.f32 %v330, %v67
    %333 = vset.pattern.permute.xlu0 2
    %334 = vperm.xlu0 %333, %v315
    %v335 = vpop.permute.xlu0 %334
    %v337 = vmul.f32 %v335, %v69
    %338 = vset.pattern.permute.xlu0 3
    %339 = vperm.xlu0 %338, %v315
    %v340 = vpop.permute.xlu0 %339
    %v342 = vmul.f32 %v340, %v71
    %343 = vset.pattern.permute.xlu0 4
    %344 = vperm.xlu0 %343, %v315
    %v345 = vpop.permute.xlu0 %344
    %v347 = vmul.f32 %v345, %v73
    %348 = vset.pattern.permute.xlu0 5
    %349 = vperm.xlu0 %348, %v315
    %v350 = vpop.permute.xlu0 %349
    %v352 = vmul.f32 %v350, %v75
    %353 = vset.pattern.permute.xlu0 6
    %354 = vperm.xlu0 %353, %v315
    %v355 = vpop.permute.xlu0 %354
    %v357 = vmul.f32 %v355, %v77
    %358 = vset.pattern.permute.xlu0 7
    %359 = vperm.xlu0 %358, %v315
    %v360 = vpop.permute.xlu0 %359
    %v362 = vmul.f32 %v360, %v79
    %363 = vset.pattern.permute.xlu0 8
    %364 = vperm.xlu0 %363, %v315
    %v365 = vpop.permute.xlu0 %364
    %v367 = vmul.f32 %v365, %v81
    %368 = vset.pattern.permute.xlu0 9
    %369 = vperm.xlu0 %368, %v315
    %v370 = vpop.permute.xlu0 %369
    %v372 = vmul.f32 %v370, %v83
    %v373 = vadd.f32 %v327, %v332
    %v374 = vadd.f32 %v337, %v342
    %v375 = vadd.f32 %v347, %v352
    %v376 = vadd.f32 %v357, %v362
    %v377 = vadd.f32 %v367, %v372
    %v378 = vadd.f32 %v373, %v374
    %v379 = vadd.f32 %v375, %v376
    %v380 = vadd.f32 %v378, %v379
    %v381 = vadd.f32 %v380, %v377
    %v382 = vadd.f32 %v321, %v381
    %v383 = vtanh.pop %v382
    %384 = vset.pattern.permute.xlu0 5
    %385 = vperm.xlu0 %384, %v55
    %v386 = vpop.permute.xlu0 %385
    %v388 = vmul.f32 %v386, %v58
    %v389 = vadd.f32 %v388, %v62
    %391 = vset.pattern.permute.xlu0 0
    %392 = vperm.xlu0 %391, %v383
    %v393 = vpop.permute.xlu0 %392
    %v395 = vmul.f32 %v393, %v65
    %396 = vset.pattern.permute.xlu0 1
    %397 = vperm.xlu0 %396, %v383
    %v398 = vpop.permute.xlu0 %397
    %v400 = vmul.f32 %v398, %v67
    %401 = vset.pattern.permute.xlu0 2
    %402 = vperm.xlu0 %401, %v383
    %v403 = vpop.permute.xlu0 %402
    %v405 = vmul.f32 %v403, %v69
    %406 = vset.pattern.permute.xlu0 3
    %407 = vperm.xlu0 %406, %v383
    %v408 = vpop.permute.xlu0 %407
    %v410 = vmul.f32 %v408, %v71
    %411 = vset.pattern.permute.xlu0 4
    %412 = vperm.xlu0 %411, %v383
    %v413 = vpop.permute.xlu0 %412
    %v415 = vmul.f32 %v413, %v73
    %416 = vset.pattern.permute.xlu0 5
    %417 = vperm.xlu0 %416, %v383
    %v418 = vpop.permute.xlu0 %417
    %v420 = vmul.f32 %v418, %v75
    %421 = vset.pattern.permute.xlu0 6
    %422 = vperm.xlu0 %421, %v383
    %v423 = vpop.permute.xlu0 %422
    %v425 = vmul.f32 %v423, %v77
    %426 = vset.pattern.permute.xlu0 7
    %427 = vperm.xlu0 %426, %v383
    %v428 = vpop.permute.xlu0 %427
    %v430 = vmul.f32 %v428, %v79
    %431 = vset.pattern.permute.xlu0 8
    %432 = vperm.xlu0 %431, %v383
    %v433 = vpop.permute.xlu0 %432
    %v435 = vmul.f32 %v433, %v81
    %436 = vset.pattern.permute.xlu0 9
    %437 = vperm.xlu0 %436, %v383
    %v438 = vpop.permute.xlu0 %437
    %v440 = vmul.f32 %v438, %v83
    %v441 = vadd.f32 %v395, %v400
    %v442 = vadd.f32 %v405, %v410
    %v443 = vadd.f32 %v415, %v420
    %v444 = vadd.f32 %v425, %v430
    %v445 = vadd.f32 %v435, %v440
    %v446 = vadd.f32 %v441, %v442
    %v447 = vadd.f32 %v443, %v444
    %v448 = vadd.f32 %v446, %v447
    %v449 = vadd.f32 %v448, %v445
    %v450 = vadd.f32 %v389, %v449
    %v451 = vtanh.pop %v450
    %452 = vset.pattern.permute.xlu0 6
    %453 = vperm.xlu0 %452, %v55
    %v454 = vpop.permute.xlu0 %453
    %v456 = vmul.f32 %v454, %v58
    %v457 = vadd.f32 %v456, %v62
    %459 = vset.pattern.permute.xlu0 0
    %460 = vperm.xlu0 %459, %v451
    %v461 = vpop.permute.xlu0 %460
    %v463 = vmul.f32 %v461, %v65
    %464 = vset.pattern.permute.xlu0 1
    %465 = vperm.xlu0 %464, %v451
    %v466 = vpop.permute.xlu0 %465
    %v468 = vmul.f32 %v466, %v67
    %469 = vset.pattern.permute.xlu0 2
    %470 = vperm.xlu0 %469, %v451
    %v471 = vpop.permute.xlu0 %470
    %v473 = vmul.f32 %v471, %v69
    %474 = vset.pattern.permute.xlu0 3
    %475 = vperm.xlu0 %474, %v451
    %v476 = vpop.permute.xlu0 %475
    %v478 = vmul.f32 %v476, %v71
    %479 = vset.pattern.permute.xlu0 4
    %480 = vperm.xlu0 %479, %v451
    %v481 = vpop.permute.xlu0 %480
    %v483 = vmul.f32 %v481, %v73
    %484 = vset.pattern.permute.xlu0 5
    %485 = vperm.xlu0 %484, %v451
    %v486 = vpop.permute.xlu0 %485
    %v488 = vmul.f32 %v486, %v75
    %489 = vset.pattern.permute.xlu0 6
    %490 = vperm.xlu0 %489, %v451
    %v491 = vpop.permute.xlu0 %490
    %v493 = vmul.f32 %v491, %v77
    %494 = vset.pattern.permute.xlu0 7
    %495 = vperm.xlu0 %494, %v451
    %v496 = vpop.permute.xlu0 %495
    %v498 = vmul.f32 %v496, %v79
    %499 = vset.pattern.permute.xlu0 8
    %500 = vperm.xlu0 %499, %v451
    %v501 = vpop.permute.xlu0 %500
    %v503 = vmul.f32 %v501, %v81
    %504 = vset.pattern.permute.xlu0 9
    %505 = vperm.xlu0 %504, %v451
    %v506 = vpop.permute.xlu0 %505
    %v508 = vmul.f32 %v506, %v83
    %v509 = vadd.f32 %v463, %v468
    %v510 = vadd.f32 %v473, %v478
    %v511 = vadd.f32 %v483, %v488
    %v512 = vadd.f32 %v493, %v498
    %v513 = vadd.f32 %v503, %v508
    %v514 = vadd.f32 %v509, %v510
    %v515 = vadd.f32 %v511, %v512
    %v516 = vadd.f32 %v514, %v515
    %v517 = vadd.f32 %v516, %v513
    %v518 = vadd.f32 %v457, %v517
    %v519 = vtanh.pop %v518
    %520 = vset.pattern.permute.xlu0 7
    %521 = vperm.xlu0 %520, %v55
    %v522 = vpop.permute.xlu0 %521
    %v524 = vmul.f32 %v522, %v58
    %v525 = vadd.f32 %v524, %v62
    %527 = vset.pattern.permute.xlu0 0
    %528 = vperm.xlu0 %527, %v519
    %v529 = vpop.permute.xlu0 %528
    %v531 = vmul.f32 %v529, %v65
    %532 = vset.pattern.permute.xlu0 1
    %533 = vperm.xlu0 %532, %v519
    %v534 = vpop.permute.xlu0 %533
    %v536 = vmul.f32 %v534, %v67
    %537 = vset.pattern.permute.xlu0 2
    %538 = vperm.xlu0 %537, %v519
    %v539 = vpop.permute.xlu0 %538
    %v541 = vmul.f32 %v539, %v69
    %542 = vset.pattern.permute.xlu0 3
    %543 = vperm.xlu0 %542, %v519
    %v544 = vpop.permute.xlu0 %543
    %v546 = vmul.f32 %v544, %v71
    %547 = vset.pattern.permute.xlu0 4
    %548 = vperm.xlu0 %547, %v519
    %v549 = vpop.permute.xlu0 %548
    %v551 = vmul.f32 %v549, %v73
    %552 = vset.pattern.permute.xlu0 5
    %553 = vperm.xlu0 %552, %v519
    %v554 = vpop.permute.xlu0 %553
    %v556 = vmul.f32 %v554, %v75
    %557 = vset.pattern.permute.xlu0 6
    %558 = vperm.xlu0 %557, %v519
    %v559 = vpop.permute.xlu0 %558
    %v561 = vmul.f32 %v559, %v77
    %562 = vset.pattern.permute.xlu0 7
    %563 = vperm.xlu0 %562, %v519
    %v564 = vpop.permute.xlu0 %563
    %v566 = vmul.f32 %v564, %v79
    %567 = vset.pattern.permute.xlu0 8
    %568 = vperm.xlu0 %567, %v519
    %v569 = vpop.permute.xlu0 %568
    %v571 = vmul.f32 %v569, %v81
    %572 = vset.pattern.permute.xlu0 9
    %573 = vperm.xlu0 %572, %v519
    %v574 = vpop.permute.xlu0 %573
    %v576 = vmul.f32 %v574, %v83
    %v577 = vadd.f32 %v531, %v536
    %v578 = vadd.f32 %v541, %v546
    %v579 = vadd.f32 %v551, %v556
    %v580 = vadd.f32 %v561, %v566
    %v581 = vadd.f32 %v571, %v576
    %v582 = vadd.f32 %v577, %v578
    %v583 = vadd.f32 %v579, %v580
    %v584 = vadd.f32 %v582, %v583
    %v585 = vadd.f32 %v584, %v581
    %v586 = vadd.f32 %v525, %v585
    %v587 = vtanh.pop %v586
    %v588 = vld [vmem:[#allocation4] sm:$0xff]
    %v589 = vld [vmem:[#allocation4 + $0x8] sm:$0xff]
    %v590 = vld [vmem:[#allocation4 + $0x10] sm:$0xff]
    %v591 = vld [vmem:[#allocation4 + $0x18] sm:$0xff]
    %v592 = vld [vmem:[#allocation4 + $0x20] sm:$0xff]
    %v593 = vld [vmem:[#allocation4 + $0x28] sm:$0xff]
    %v594 = vld [vmem:[#allocation4 + $0x30] sm:$0xff]
    %v595 = vld [vmem:[#allocation4 + $0x38] sm:$0xff]
    %v596 = vld [vmem:[#allocation4 + $0x40] sm:$0xff]
    %v597 = vld [vmem:[#allocation4 + $0x48] sm:$0xff]
    %v598 = vld [vmem:[#allocation4 + $0x50] sm:$0xff]
    %v599 = vld [vmem:[#allocation4 + $0x58] sm:$0xff]
    %v600 = vld [vmem:[#allocation4 + $0x60] sm:$0xff]
    %v601 = vld [vmem:[#allocation4 + $0x68] sm:$0xff]
    %v602 = vld [vmem:[#allocation4 + $0x70] sm:$0xff]
    %v603 = vld [vmem:[#allocation4 + $0x78] sm:$0xff]
    %v604 = vld [vmem:[%s5] sm:$0x1]
    %v606 = vperm.slane %v604, 0
    %608 = vmatpush.msra.mxu0 %v603
    %609 = vmatpush.msra.mxu0 %v602
    %610 = vmatpush.msra.mxu0 %v601
    %611 = vmatpush.msra.mxu0 %v600
    %612 = vmatpush.msra.mxu0 %v599
    %613 = vmatpush.msra.mxu0 %v598
    %614 = vmatpush.msra.mxu0 %v597
    %615 = vmatpush.msra.mxu0 %v596
    %616 = vmatpush.msra.mxu0 %v595
    %617 = vmatpush.msra.mxu0 %v594
    %618 = vmatpush.msra.mxu0 %v593
    %619 = vmatpush.msra.mxu0 %v592
    %620 = vmatpush.msra.mxu0 %v591
    %621 = vmatpush.msra.mxu0 %v590
    %622 = vmatpush.msra.mxu0 %v589
    %623 = vmatpush.msra.mxu0 %v588
    %624 = vmatmul.f32.gmra.mxu0 %v587
    %v625 = vpop.f32.mrf.mxu0
    %v626 = vadd.f32 %v606, %v625
    %627 = vdwg.mxu0
    %628 = vst [vmem:[%s6] sm:$0xff] %v626
    // Predicated region
    $region34: #{simple_rnn_forward.1} parent=1 // pred_check
      _
    $region35: #{simple_rnn_forward.1} parent=1 // pred_check_branch
      %630 = sbr.rel (0) target = $region37
    $region36: #{simple_rnn_forward.1} parent=1 // pred_region
      _
    $region37: #{simple_rnn_forward.1} parent=1 // pred_fallthru
      _
    // Predicated region
    $region38: #{simple_rnn_forward.1} parent=1 // pred_check
      _
    $region39: #{simple_rnn_forward.1} parent=1 // pred_check_branch
      %632 = sbr.rel (0) target = $region41
    $region40: #{simple_rnn_forward.1} parent=1 // pred_region
      _
    $region41: #{simple_rnn_forward.1} parent=1 // pred_fallthru
      _
    %633 = vsyncpa [#allocation3], 1
    %634 = vsyncpa [#allocation5], 1

</llo_original>
